<compile_context>
chip_gen: v7x
topology: tpu7x:2x2x1
jax: 0.10.0
libtpu: 0.0.40
codegen_flags: <defaults>
</compile_context>

<pallas_src>
import jax
import jax.numpy as jnp
from jax.experimental import pallas as pl
from jax.experimental.pallas import tpu as pltpu

LANES = 128       # vreg lane width (last dim)
ACC_ROWS = 512    # fixed accumulator: 512 x 128 f32 = 256 KiB VMEM


def _tpu_config():
    """Returns (max_rows_per_step, vmem_limit_bytes_or_None, num_shards)."""
    kind = ""
    try:
        dev = jax.devices()[0]
        if dev.platform == "tpu":
            kind = dev.device_kind.lower()
    except Exception:
        pass
    if "v5" in kind:                      # v5e/v5p: default scoped VMEM 16 MiB
        return 4096, 32 * 1024 * 1024, 1
    if "v6" in kind or "trillium" in kind:  # v6e: 128 MiB physical VMEM
        return 8192, 64 * 1024 * 1024, 1
    if "7" in kind:                       # v7x: 64 MiB physical VMEM, 2 TCs
        return 8192, 40 * 1024 * 1024, 2
    return 4096, None, 1                  # unknown generation: conservative


def _compiler_params(dimension_semantics, vmem_limit_bytes):
    kwargs = dict(dimension_semantics=dimension_semantics)
    if vmem_limit_bytes is not None:
        kwargs["vmem_limit_bytes"] = vmem_limit_bytes
    return pltpu.CompilerParams(**kwargs)


def _contrib(pred, label):
    d = pred.astype(jnp.float32) - label.astype(jnp.float32)
    a = jnp.abs(d)
    return a * (0.8 + 0.2 * a)            # == 0.8*|d| + 0.2*d*d, fewer VALU ops


def _single_block_kernel(pred_ref, label_ref, out_ref):
    out_ref[0, 0] = jnp.sum(_contrib(pred_ref[...], label_ref[...]))


def _make_stream_kernel(tm, rows, num_shards, steps, ragged, sharded):
    folds = tm // ACC_ROWS

    def fold(x):
        # Split the major dim only (layout-free) then reduce with VPU adds.
        return x.reshape(folds, ACC_ROWS, LANES).sum(axis=0)

    def kernel(pred_ref, label_ref, out_ref, acc_ref):
        if sharded:
            c = pl.program_id(0)
            i = pl.program_id(1)
        else:
            c = 0
            i = pl.program_id(0)

        @pl.when(i == 0)
        def _():
            acc_ref[...] = jnp.zeros_like(acc_ref)

        contrib = _contrib(pred_ref[...], label_ref[...])

        if ragged:
            # Only the final step of each shard can hold out-of-range rows.
            @pl.when(i < steps - 1)
            def _():
                acc_ref[...] += fold(contrib)

            @pl.when(i == steps - 1)
            def _():
                blk = i * num_shards + c          # nominal global block index
                row_ids = blk * tm + jax.lax.broadcasted_iota(
                    jnp.int32, (tm, LANES), 0)
                acc_ref[...] += fold(jnp.where(row_ids < rows, contrib, 0.0))
        else:
            acc_ref[...] += fold(contrib)

        @pl.when(i == steps - 1)
        def _():
            out_ref[0, 0] = jnp.sum(acc_ref[...])  # single epilogue reduce

    return kernel


def _pallas_partial_sum(p2d, l2d, max_tm, vmem_limit, num_shards):
    """Sum of 0.8*|d| + 0.2*d^2 over a lane-dense (rows, 128) slab."""
    rows = p2d.shape[0]

    if rows <= max_tm:
        # Whole array is a single tile: no scratch, trivial epilogue.
        total = pl.pallas_call(
            _single_block_kernel,
            out_shape=jax.ShapeDtypeStruct((1, 1), jnp.float32),
            grid_spec=pltpu.PrefetchScalarGridSpec(
                num_scalar_prefetch=0,
                grid=(1,),
                in_specs=[
                    pl.BlockSpec((rows, LANES), lambda i: (0, 0)),
                    pl.BlockSpec((rows, LANES), lambda i: (0, 0)),
                ],
                out_specs=pl.BlockSpec((1, 1), lambda i: (0, 0),
                                       memory_space=pltpu.SMEM),
            ),
            compiler_params=_compiler_params(("arbitrary",), vmem_limit),
        )(p2d, l2d)
        return total[0, 0]

    tm = max_tm                         # multiple of 8 and of ACC_ROWS
    n_blocks = pl.cdiv(rows, tm)
    if num_shards > n_blocks:
        num_shards = 1
    sharded = num_shards > 1
    steps = pl.cdiv(n_blocks, num_shards)
    phantom = num_shards * steps != n_blocks   # a shard has an extra step
    ragged = phantom or (rows % tm != 0)
    last_block = n_blocks - 1

    def in_map(*idx):
        if sharded:
            c, i = idx
        else:
            (i,) = idx
            c = 0
        blk = i * num_shards + c
        if phantom:
            blk = jnp.minimum(blk, last_block)   # phantom step re-reads a real
        return (blk, 0)                          # block; kernel masks it to 0

    if sharded:
        grid = (num_shards, steps)
        out_map = lambda c, i: (c, 0)
        sem = ("parallel", "arbitrary")          # shard axis across TensorCores
    else:
        grid = (steps,)
        out_map = lambda i: (0, 0)
        sem = ("arbitrary",)

    kernel = _make_stream_kernel(tm, rows, num_shards, steps, ragged, sharded)

    partials = pl.pallas_call(
        kernel,
        out_shape=jax.ShapeDtypeStruct((num_shards, 1), jnp.float32),
        grid_spec=pltpu.PrefetchScalarGridSpec(
            num_scalar_prefetch=0,
            grid=grid,
            in_specs=[
                pl.BlockSpec((tm, LANES), in_map),
                pl.BlockSpec((tm, LANES), in_map),
            ],
            out_specs=pl.BlockSpec((1, 1), out_map, memory_space=pltpu.SMEM),
            scratch_shapes=[pltpu.VMEM((ACC_ROWS, LANES), jnp.float32)],
        ),
        compiler_params=_compiler_params(sem, vmem_limit),
    )(p2d, l2d)
    return jnp.sum(partials)


@jax.jit
def mix_loss(pred, label):
    """0.8 * mean(|pred - label|) + 0.2 * mean((pred - label)**2)."""
    assert pred.shape == label.shape
    n = pred.size
    max_tm, vmem_limit, num_shards = _tpu_config()

    flat_p = pred.reshape(-1)
    flat_l = label.reshape(-1)

    main = (n // LANES) * LANES
    rows = main // LANES

    total = jnp.float32(0.0)
    if rows > 0:
        # No full-tensor pad: when n % 128 == 0 this is a pure (free) reshape.
        p_main = flat_p if main == n else flat_p[:main]
        l_main = flat_l if main == n else flat_l[:main]
        p2d = p_main.reshape(rows, LANES)
        l2d = l_main.reshape(rows, LANES)
        total = total + _pallas_partial_sum(p2d, l2d, max_tm, vmem_limit,
                                            num_shards)

    if main != n:
        # <=127-element tail handled with plain jnp inside the same jit.
        total = total + jnp.sum(_contrib(flat_p[main:], flat_l[main:]))

    # Fold the mean (1/n) outside the kernel; 1/n computed in double precision.
    return total * jnp.float32(1.0 / n)


if __name__ == "__main__":
    key = jax.random.PRNGKey(0)
    k1, k2 = jax.random.split(key)
    # NCHW inputs, like the PyTorch module would receive.
    pred = jax.random.normal(k1, (2, 4, 16, 16), dtype=jnp.float32)
    label = jax.random.normal(k2, (2, 4, 16, 16), dtype=jnp.float32)

    loss = jax.block_until_ready(mix_loss(pred, label))

    # Pure-JAX reference check.
    d = pred - label
    ref = 0.8 * jnp.mean(jnp.abs(d)) + 0.2 * jnp.mean(d * d)
    assert jnp.allclose(loss, ref, rtol=1e-5, atol=1e-6), (loss, ref)

    print("KERNEL_OK")
</pallas_src>

<mosaic_0001>
module attributes {stable_mosaic.version = 11 : i64} {
  func.func @_single_block_kernel(%arg0: i32, %arg1: memref<16x128xf32, #tpu.memory_space<vmem>>, %arg2: memref<16x128xf32, #tpu.memory_space<vmem>>, %arg3: memref<1x1xf32, #tpu.memory_space<smem>>) attributes {dimension_semantics = [#tpu.dimension_semantics<arbitrary>], iteration_bounds = array<i64: 1>, scalar_prefetch = 0 : i64, scratch_operands = 0 : i64, tpu.core_type = #tpu.core_type<tc>, window_params = [{pipeline_mode = #tpu.pipeline_mode<synchronous>, transform_indices = @transform_0, window_bounds = array<i64: 16, 128>}, {pipeline_mode = #tpu.pipeline_mode<synchronous>, transform_indices = @transform_1, window_bounds = array<i64: 16, 128>}, {transform_indices = @transform_2, window_bounds = array<i64: 1, 1>}]} {
    %c0 = arith.constant 0 : index
    %c0_0 = arith.constant 0 : index
    %0 = vector.load %arg1[%c0, %c0_0] : memref<16x128xf32, #tpu.memory_space<vmem>>, vector<16x128xf32>
    %c0_1 = arith.constant 0 : index
    %c0_2 = arith.constant 0 : index
    %1 = vector.load %arg2[%c0_1, %c0_2] : memref<16x128xf32, #tpu.memory_space<vmem>>, vector<16x128xf32>
    %2 = arith.subf %0, %1 : vector<16x128xf32>
    %3 = math.absf %2 : vector<16x128xf32>
    %cst = arith.constant 2.000000e-01 : f32
    %4 = vector.broadcast %cst : f32 to vector<16x128xf32>
    %5 = arith.mulf %4, %3 : vector<16x128xf32>
    %cst_3 = arith.constant 8.000000e-01 : f32
    %6 = vector.broadcast %cst_3 : f32 to vector<16x128xf32>
    %7 = arith.addf %6, %5 : vector<16x128xf32>
    %8 = arith.mulf %3, %7 : vector<16x128xf32>
    %9 = vector.shape_cast %8 : vector<16x128xf32> to vector<1x16x128xf32>
    %cst_4 = arith.constant dense<0.000000e+00> : vector<1xf32>
    %10 = vector.multi_reduction <add>, %9, %cst_4 [1, 2] : vector<1x16x128xf32> to vector<1xf32>
    %11 = vector.shape_cast %10 : vector<1xf32> to vector<1x1x1xf32>
    %12 = vector.extract %11[0, 0, 0] : f32 from vector<1x1x1xf32>
    %c0_5 = arith.constant 0 : index
    %c0_6 = arith.constant 0 : index
    %13 = memref.load %arg3[%c0_5, %c0_6] : memref<1x1xf32, #tpu.memory_space<smem>>
    memref.store %12, %arg3[%c0_5, %c0_6] : memref<1x1xf32, #tpu.memory_space<smem>>
    return
  }
  func.func @transform_0(%arg0: i32) -> (i32, i32) {
    %c0_i32 = arith.constant 0 : i32
    %c0_i32_0 = arith.constant 0 : i32
    %c0_i32_1 = arith.constant 0 : i32
    return %c0_i32, %c0_i32_0 : i32, i32
  }
  func.func @transform_1(%arg0: i32) -> (i32, i32) {
    %c0_i32 = arith.constant 0 : i32
    %c0_i32_0 = arith.constant 0 : i32
    %c0_i32_1 = arith.constant 0 : i32
    return %c0_i32, %c0_i32_0 : i32, i32
  }
  func.func @transform_2(%arg0: i32) -> (i32, i32) {
    %c0_i32 = arith.constant 0 : i32
    %c0_i32_0 = arith.constant 0 : i32
    %c0_i32_1 = arith.constant 0 : i32
    return %c0_i32, %c0_i32_0 : i32, i32
  }
}

</mosaic_0001>

<llo_original>
// kernel: mix_loss.1
$region0: #{mix_loss.1}
  #allocation0 [shape = 'u32[]', space=smem, size = 0x4, offset = 0x4, fixed_abs, tag = 'smem constant byte address 0x4 - core index']
  #allocation1 [shape = 'u32[144,128]{1,0:T(1,128)}', space=vmem, size = 0x12000, scoped, tag = 'internal scratch']
  %s0 = inlined_call_operand.vmem [shape: f32[16,128], index: 0, kind: input, shape index: {}]
  %s1 = inlined_call_operand.vmem [shape: f32[16,128], index: 1, kind: input, shape index: {}]
  %s2 = inlined_call_operand.hbm [shape: f32[1,1], index: 2, kind: output, shape index: {}]
  %s3 = sld [smem:[#allocation0]]
  $region18: #{mix_loss.1} parent=0
    _
  %s5 = ssub.s32 1, %s3
  %s6 = scalar_select 0, %s5, %s3
  $region1: #{mix_loss.1} parent=0
    #allocation2 [shape = 'u8[512]{0}', space=smem, size = 0x200, scoped, tag = 'output window, operand 0, single buffered']
    #allocation3 [shape = 's32[1]{0}', space=sflag, size = 0x4, scoped, tag = 'scoped memory for mix_loss.1']
    %7 = vsyncpa [#allocation3], 0
    // Predicated region
    $region2: #{mix_loss.1} parent=1 // pred_check
      _
    $region3: #{mix_loss.1} parent=1 // pred_check_branch
      %9 = sbr.rel (0) target = $region5
    $region4: #{mix_loss.1} parent=1 // pred_region
      _
    $region5: #{mix_loss.1} parent=1 // pred_fallthru
      _
    // Predicated region
    $region6: #{mix_loss.1} parent=1 // pred_check
      _
    $region7: #{mix_loss.1} parent=1 // pred_check_branch
      %11 = sbr.rel (0) target = $region9
    $region8: #{mix_loss.1} parent=1 // pred_region
      _
    $region9: #{mix_loss.1} parent=1 // pred_fallthru
      _
    %v12 = vld [vmem:[%s0] sm:$0xff]
    %v13 = vld [vmem:[%s0 + $0x8] sm:$0xff]
    %v14 = vld [vmem:[%s1] sm:$0xff]
    %v15 = vld [vmem:[%s1 + $0x8] sm:$0xff]
    %v16 = vsub.f32 %v12, %v14
    %v17 = vsub.f32 %v13, %v15
    %v18 = vand.u32 2147483647, %v16
    %v19 = vand.u32 2147483647, %v17
    %v20 = vmul.f32 %v18, 0.2
    %v21 = vmul.f32 %v19, 0.2
    %v22 = vadd.f32 %v20, 0.8
    %v23 = vadd.f32 %v21, 0.8
    %v24 = vmul.f32 %v18, %v22
    %v25 = vmul.f32 %v19, %v23
    %v26 = vadd.f32 %v24, %v25
    %27 = vadd.xlane.f32.xlu0 %v26
    %v28 = vpop.xlane.xlu0 %27
    %v29 = vrot.slane %v28, 4
    %v30 = vadd.f32 %v28, %v29
    %v31 = vrot.slane %v30, 2
    %v32 = vadd.f32 %v30, %v31
    %v33 = vrot.slane %v32, 1
    %v34 = vadd.f32 %v32, %v33
    %s35 = vtos %v34
    %s36 = scalar_lea.smem [#allocation2], 0
    %37 = sst [smem:[%s36]] %s35
    // Predicated region
    $region10: #{mix_loss.1} parent=1 // pred_check
      _
    $region11: #{mix_loss.1} parent=1 // pred_check_branch
      %39 = sbr.rel (0) target = $region13
    $region12: #{mix_loss.1} parent=1 // pred_region
      %s41 = ssub.s32 16, 16
      %42 = vsyncadd [#allocation3], %s41
      %45 = dma.smem_to_hbm [#allocation2], 16, %s2, [#allocation3]
    $region13: #{mix_loss.1} parent=1 // pred_fallthru
      _
    // Predicated region
    $region14: #{mix_loss.1} parent=1 // pred_check
      _
    $region15: #{mix_loss.1} parent=1 // pred_check_branch
      %47 = sbr.rel (0) target = $region17
    $region16: #{mix_loss.1} parent=1 // pred_region
      %48 = dma.done [#allocation3], 16
    $region17: #{mix_loss.1} parent=1 // pred_fallthru
      _
    %49 = sfence
    %50 = vsyncpa [#allocation3], 1

</llo_original>
